<compile_context>
chip_gen: v6e
topology: v6e:2x2x1
jax: 0.10.0
libtpu: 0.0.40
codegen_flags: <defaults>
</compile_context>

<pallas_src>
import math

import jax
import jax.numpy as jnp
from jax.experimental import pallas as pl
from jax.experimental.pallas import tpu as pltpu


def make_positional_encoding(d_model: int, max_len: int = 750) -> jnp.ndarray:
    """Deterministic buffer construction, matching the PyTorch __init__."""
    position = jnp.arange(max_len, dtype=jnp.float32)[:, None]            # (max_len, 1)
    div_term = jnp.exp(
        jnp.arange(0, d_model, 2, dtype=jnp.float32)
        * (-math.log(10000.0) / d_model)
    )                                                                     # (ceil(d/2),)
    ang = position * div_term                                             # (max_len, ceil(d/2))
    pe = jnp.zeros((max_len, 1, d_model), dtype=jnp.float32)
    pe = pe.at[:, 0, 0::2].set(jnp.sin(ang)[:, : (d_model + 1) // 2])
    pe = pe.at[:, 0, 1::2].set(jnp.cos(ang)[:, : d_model // 2])
    return pe


def _add_bcast_kernel(x_ref, pe_ref, o_ref):
    # x: (ts, B, D); pe: (ts, 1, D) -> broadcast over the batch axis in VMEM.
    # The add is done in the output (promoted) dtype to match PyTorch promotion.
    o_ref[...] = x_ref[...].astype(o_ref.dtype) + pe_ref[...].astype(o_ref.dtype)
    # TODO(synk): optionally generate pe in-kernel (iota + sin/cos on the idle
    # EUP slot) to drop the pe DMA stream entirely (~1/(2B+1) of HBM traffic,
    # mainly a v5e win).


def _sublane_multiple(itemsize: int) -> int:
    return {4: 8, 2: 16, 1: 32}.get(itemsize, 8)


def _ceil_to(n: int, m: int) -> int:
    return -(-n // m) * m


def positional_encoding_forward(
    x: jnp.ndarray,
    pe: jnp.ndarray,
    *,
    use_pallas: bool | None = None,
    vmem_budget_bytes: int = 24 << 20,   # live double-buffered tiles budget
    donate_x: bool = False,
) -> jnp.ndarray:
    """x: (S, B, D); pe: (max_len, 1, D) float32 buffer.  Returns x + pe[:S]."""
    S, B, D = x.shape
    pe_s = pe[:S]                                            # (S, 1, D), keeps pe dtype
    out_dtype = jnp.result_type(x.dtype, pe_s.dtype)         # PyTorch promotion

    isx = jnp.dtype(x.dtype).itemsize
    ispe = jnp.dtype(pe_s.dtype).itemsize
    iso = jnp.dtype(out_dtype).itemsize
    total_traffic = x.size * isx + S * D * ispe + x.size * iso

    if use_pallas is None:
        # Below ~4 MiB of traffic the pallas_call launch/DMA-setup overhead
        # dominates (worst on v7x at 3.2 TB/s); let XLA fuse the add.
        use_pallas = total_traffic >= (4 << 20)
    if not use_pallas:
        return x + pe_s

    # ---- clamp the VMEM budget against the actual chip (v7x: 64 MiB / TC) ----
    try:
        vmem_cap = int(pltpu.get_tpu_info().vmem_capacity_bytes)
    except Exception:                                         # pragma: no cover
        vmem_cap = 64 << 20
    budget = max(1 << 20, min(int(vmem_budget_bytes), vmem_cap // 4))

    # ---- honest per-sequence-position VMEM sizes (account for (sub,128) padding) ----
    lane_d = _ceil_to(D, 128)
    row_x = _ceil_to(B, _sublane_multiple(isx)) * lane_d * isx
    row_pe = _ceil_to(1, _sublane_multiple(ispe)) * lane_d * ispe
    row_o = _ceil_to(B, _sublane_multiple(iso)) * lane_d * iso
    row_bytes = row_x + row_pe + row_o

    budget_rows = max(1, budget // (2 * row_bytes))           # x/pe/out double-buffered

    # ---- tile the sequence axis: big tiles, but >= ~8 grid steps when possible
    #      (v7x megacore sharding + DMA overlap), and >= ~256 KiB per tile. ----
    target_steps = 8
    min_tile_rows = max(1, -(-(256 << 10) // row_bytes))
    ts = min(S, budget_rows)
    ts = min(ts, max(-(-S // target_steps), min_tile_rows))
    ts = max(1, min(ts, S))

    grid = (pl.cdiv(S, ts),)
    vmem_need = 2 * ts * row_bytes + (4 << 20)
    vmem_limit = int(min(vmem_cap, max(vmem_need, 16 << 20)))

    aliases = {0: 0} if (donate_x and x.dtype == out_dtype) else {}

    return pl.pallas_call(
        _add_bcast_kernel,
        out_shape=jax.ShapeDtypeStruct((S, B, D), out_dtype),
        grid_spec=pltpu.PrefetchScalarGridSpec(
            num_scalar_prefetch=0,
            grid=grid,
            in_specs=[
                pl.BlockSpec((ts, B, D), lambda i: (i, 0, 0)),   # x tile
                pl.BlockSpec((ts, 1, D), lambda i: (i, 0, 0)),   # pe tile (no batch bcast in HBM)
            ],
            out_specs=pl.BlockSpec((ts, B, D), lambda i: (i, 0, 0)),
        ),
        compiler_params=pltpu.CompilerParams(
            dimension_semantics=("parallel",),
            vmem_limit_bytes=vmem_limit,
        ),
        input_output_aliases=aliases,
    )(x, pe_s)


if __name__ == "__main__":
    key = jax.random.PRNGKey(0)
    k1, k2, k3 = jax.random.split(key, 3)

    # -- Test 1: tiny module-consistent shape (S=8, B=2, D=32), force Pallas.
    S, B, D = 8, 2, 32
    pe = make_positional_encoding(D, max_len=750)
    x = jax.random.normal(k1, (S, B, D), dtype=jnp.float32)
    out = jax.block_until_ready(positional_encoding_forward(x, pe, use_pallas=True))
    ref = x + pe[:S]
    assert out.shape == ref.shape and out.dtype == ref.dtype
    assert jnp.allclose(out, ref, atol=1e-6), "mismatch vs reference (test 1)"

    # Auto-dispatch (tiny -> plain XLA add) must agree too.
    out_auto = jax.block_until_ready(positional_encoding_forward(x, pe))
    assert jnp.allclose(out_auto, ref, atol=1e-6), "mismatch vs reference (auto path)"

    # -- Test 2: lane-dense D (multiple of 128) with a multi-step grid
    #    (small budget forces tiling along S; ragged tail handled by cdiv).
    S2, B2, D2 = 64, 2, 128
    pe2 = make_positional_encoding(D2, max_len=750)
    x2 = jax.random.normal(k2, (S2, B2, D2), dtype=jnp.float32)
    out2 = jax.block_until_ready(
        positional_encoding_forward(x2, pe2, use_pallas=True,
                                    vmem_budget_bytes=64 * 1024)
    )
    ref2 = x2 + pe2[:S2]
    assert jnp.allclose(out2, ref2, atol=1e-6), "mismatch vs reference (test 2)"

    # -- Test 3: feature count not a multiple of 128 -> same kernel, padded
    #    minor dims; in-kernel broadcast over batch still correct.
    S3, B3, D3 = 8, 3, 24
    pe3 = make_positional_encoding(D3, max_len=750)
    x3 = jax.random.normal(k3, (S3, B3, D3), dtype=jnp.float32)
    out3 = jax.block_until_ready(positional_encoding_forward(x3, pe3, use_pallas=True))
    ref3 = x3 + pe3[:S3]
    assert jnp.allclose(out3, ref3, atol=1e-6), "mismatch vs reference (test 3)"

    # -- Test 4: bf16 x + float32 pe buffer -> float32 output (PyTorch promotion).
    x4 = x2.astype(jnp.bfloat16)
    out4 = jax.block_until_ready(positional_encoding_forward(x4, pe2, use_pallas=True))
    ref4 = x4 + pe2[:S2]
    assert out4.dtype == jnp.float32, "promotion mismatch (test 4)"
    assert jnp.allclose(out4, ref4, atol=1e-6), "mismatch vs reference (test 4)"

    print("KERNEL_OK")
</pallas_src>

<mosaic_0001>
module attributes {stable_mosaic.version = 11 : i64} {
  func.func @_add_bcast_kernel(%arg0: i32, %arg1: memref<8x2x32xf32, #tpu.memory_space<vmem>>, %arg2: memref<8x1x32xf32, #tpu.memory_space<vmem>>, %arg3: memref<8x2x32xf32, #tpu.memory_space<vmem>>) attributes {dimension_semantics = [#tpu.dimension_semantics<parallel>], iteration_bounds = array<i64: 1>, scalar_prefetch = 0 : i64, scratch_operands = 0 : i64, tpu.core_type = #tpu.core_type<tc>, window_params = [{transform_indices = @transform_0, window_bounds = array<i64: 8, 2, 32>}, {transform_indices = @transform_1, window_bounds = array<i64: 8, 1, 32>}, {transform_indices = @transform_2, window_bounds = array<i64: 8, 2, 32>}]} {
    %c0 = arith.constant 0 : index
    %c0_0 = arith.constant 0 : index
    %c0_1 = arith.constant 0 : index
    %0 = vector.load %arg1[%c0, %c0_0, %c0_1] : memref<8x2x32xf32, #tpu.memory_space<vmem>>, vector<8x2x32xf32>
    %c0_2 = arith.constant 0 : index
    %c0_3 = arith.constant 0 : index
    %c0_4 = arith.constant 0 : index
    %1 = vector.load %arg2[%c0_2, %c0_3, %c0_4] : memref<8x1x32xf32, #tpu.memory_space<vmem>>, vector<8x1x32xf32>
    %2 = vector.broadcast %1 : vector<8x1x32xf32> to vector<8x2x32xf32>
    %3 = arith.addf %0, %2 : vector<8x2x32xf32>
    %c0_5 = arith.constant 0 : index
    %c0_6 = arith.constant 0 : index
    %c0_7 = arith.constant 0 : index
    %4 = vector.load %arg3[%c0_5, %c0_6, %c0_7] : memref<8x2x32xf32, #tpu.memory_space<vmem>>, vector<8x2x32xf32>
    tpu.vector_store %arg3[%c0_5, %c0_6, %c0_7], %3 {strides = array<i32>} : memref<8x2x32xf32, #tpu.memory_space<vmem>>, vector<8x2x32xf32>,
    return
  }
  func.func @transform_0(%arg0: i32) -> (i32, i32, i32) {
    %c0_i32 = arith.constant 0 : i32
    %c0_i32_0 = arith.constant 0 : i32
    %c0_i32_1 = arith.constant 0 : i32
    return %arg0, %c0_i32, %c0_i32_0 : i32, i32, i32
  }
  func.func @transform_1(%arg0: i32) -> (i32, i32, i32) {
    %c0_i32 = arith.constant 0 : i32
    %c0_i32_0 = arith.constant 0 : i32
    %c0_i32_1 = arith.constant 0 : i32
    return %arg0, %c0_i32, %c0_i32_0 : i32, i32, i32
  }
  func.func @transform_2(%arg0: i32) -> (i32, i32, i32) {
    %c0_i32 = arith.constant 0 : i32
    %c0_i32_0 = arith.constant 0 : i32
    %c0_i32_1 = arith.constant 0 : i32
    return %arg0, %c0_i32, %c0_i32_0 : i32, i32, i32
  }
}

</mosaic_0001>

<llo_original>
// kernel: tpu_custom_call.1
$region0: #{tpu_custom_call.1}
  #allocation0 [shape = 'u32[]', space=smem, size = 0x4, offset = 0x4, fixed_abs, tag = 'smem constant byte address 0x4 - core index']
  #allocation1 [shape = 'u32[144,128]{1,0:T(1,128)}', space=vmem, size = 0x12000, scoped, tag = 'internal scratch']
  %s0 = inlined_call_operand.hbm [shape: f32[8,2,32], index: 0, kind: input, shape index: {}]
  %s1 = inlined_call_operand.hbm [shape: f32[8,1,32], index: 1, kind: input, shape index: {}]
  %s2 = inlined_call_operand.hbm [shape: f32[8,2,32], index: 2, kind: output, shape index: {}]
  %s3 = sld [smem:[#allocation0]]
  $region26: #{tpu_custom_call.1} parent=0
    _
  %s5 = ssub.s32 1, %s3
  %s6 = scalar_select 0, %s5, %s3
  $region1: #{tpu_custom_call.1} parent=0
    #allocation2 [shape = 'u8[8192]{0}', space=vmem, size = 0x2000, scoped, tag = 'input window, operand 0, single buffered']
    #allocation3 [shape = 's32[1]{0}', space=sflag, size = 0x4, scoped, tag = 'scoped memory for tpu_custom_call.1']
    #allocation4 [shape = 's32[1]{0}', space=sflag, size = 0x4, scoped, tag = 'scoped memory for tpu_custom_call.1']
    #allocation5 [shape = 'u8[4096]{0}', space=vmem, size = 0x1000, scoped, tag = 'input window, operand 1, single buffered']
    #allocation6 [shape = 's32[1]{0}', space=sflag, size = 0x4, scoped, tag = 'scoped memory for tpu_custom_call.1']
    #allocation7 [shape = 'u8[8192]{0}', space=vmem, size = 0x2000, scoped, tag = 'output window, operand 0, single buffered']
    %7 = vsyncpa [#allocation3], 0
    %8 = vsyncpa [#allocation6], 0
    %9 = vsyncpa [#allocation4], 0
    // Predicated region
    $region2: #{tpu_custom_call.1} parent=1 // pred_check
      _
    $region3: #{tpu_custom_call.1} parent=1 // pred_check_branch
      %11 = sbr.rel (0) target = $region5
    $region4: #{tpu_custom_call.1} parent=1 // pred_region
      %s13 = ssub.s32 256, 256
      %14 = vsyncadd [#allocation3], %s13
      %s15 = sshll.u32 [#allocation2], 4
      %s16 = int_to_ptr.vmem [resolvable:$true] %s15
      %21 = dma.hbm_to_vmem [thread:$0]  %s0, 256, %s16, [#allocation3], 32, 32, 2
    $region5: #{tpu_custom_call.1} parent=1 // pred_fallthru
      _
    // Predicated region
    $region6: #{tpu_custom_call.1} parent=1 // pred_check
      _
    $region7: #{tpu_custom_call.1} parent=1 // pred_check_branch
      %23 = sbr.rel (0) target = $region9
    $region8: #{tpu_custom_call.1} parent=1 // pred_region
      %s25 = ssub.s32 128, 128
      %26 = vsyncadd [#allocation6], %s25
      %s27 = sshll.u32 [#allocation5], 4
      %s28 = int_to_ptr.vmem [resolvable:$true] %s27
      %33 = dma.hbm_to_vmem [thread:$0]  %s1, 128, %s28, [#allocation6], 16, 16, 1
    $region9: #{tpu_custom_call.1} parent=1 // pred_fallthru
      _
    // Predicated region
    $region10: #{tpu_custom_call.1} parent=1 // pred_check
      _
    $region11: #{tpu_custom_call.1} parent=1 // pred_check_branch
      %35 = sbr.rel (0) target = $region13
    $region12: #{tpu_custom_call.1} parent=1 // pred_region
      %36 = dma.done [#allocation3], 256
    $region13: #{tpu_custom_call.1} parent=1 // pred_fallthru
      _
    // Predicated region
    $region14: #{tpu_custom_call.1} parent=1 // pred_check
      _
    $region15: #{tpu_custom_call.1} parent=1 // pred_check_branch
      %38 = sbr.rel (0) target = $region17
    $region16: #{tpu_custom_call.1} parent=1 // pred_region
      %39 = dma.done [#allocation6], 128
    $region17: #{tpu_custom_call.1} parent=1 // pred_fallthru
      _
    %v40 = vld [vmem:[#allocation2] sm:$0x3]
    %v41 = vld [vmem:[#allocation2 + $0x2] sm:$0x3]
    %v42 = vld [vmem:[#allocation2 + $0x4] sm:$0x3]
    %v43 = vld [vmem:[#allocation2 + $0x6] sm:$0x3]
    %v44 = vld [vmem:[#allocation2 + $0x8] sm:$0x3]
    %v45 = vld [vmem:[#allocation2 + $0xa] sm:$0x3]
    %v46 = vld [vmem:[#allocation2 + $0xc] sm:$0x3]
    %v47 = vld [vmem:[#allocation2 + $0xe] sm:$0x3]
    %v48 = vld [vmem:[#allocation5] sm:$0x1]
    %v49 = vld [vmem:[#allocation5 + $0x1] sm:$0x1]
    %v50 = vld [vmem:[#allocation5 + $0x2] sm:$0x1]
    %v51 = vld [vmem:[#allocation5 + $0x3] sm:$0x1]
    %v52 = vld [vmem:[#allocation5 + $0x4] sm:$0x1]
    %v53 = vld [vmem:[#allocation5 + $0x5] sm:$0x1]
    %v54 = vld [vmem:[#allocation5 + $0x6] sm:$0x1]
    %v55 = vld [vmem:[#allocation5 + $0x7] sm:$0x1]
    %v64 = vlaneseq
    %v65 = vshrl.u32 %v64, 7
    %v66 = vsub.s32 0, %v65
    %v67 = vrot.slane %v48, %v66
    %v68 = vlaneseq
    %v69 = vshrl.u32 %v68, 7
    %v70 = vsub.s32 0, %v69
    %v71 = vrot.slane %v49, %v70
    %v72 = vlaneseq
    %v73 = vshrl.u32 %v72, 7
    %v74 = vsub.s32 0, %v73
    %v75 = vrot.slane %v50, %v74
    %v76 = vlaneseq
    %v77 = vshrl.u32 %v76, 7
    %v78 = vsub.s32 0, %v77
    %v79 = vrot.slane %v51, %v78
    %v80 = vlaneseq
    %v81 = vshrl.u32 %v80, 7
    %v82 = vsub.s32 0, %v81
    %v83 = vrot.slane %v52, %v82
    %v84 = vlaneseq
    %v85 = vshrl.u32 %v84, 7
    %v86 = vsub.s32 0, %v85
    %v87 = vrot.slane %v53, %v86
    %v88 = vlaneseq
    %v89 = vshrl.u32 %v88, 7
    %v90 = vsub.s32 0, %v89
    %v91 = vrot.slane %v54, %v90
    %v92 = vlaneseq
    %v93 = vshrl.u32 %v92, 7
    %v94 = vsub.s32 0, %v93
    %v95 = vrot.slane %v55, %v94
    %v104 = vadd.f32 %v40, %v67
    %v105 = vadd.f32 %v41, %v71
    %v106 = vadd.f32 %v42, %v75
    %v107 = vadd.f32 %v43, %v79
    %v108 = vadd.f32 %v44, %v83
    %v109 = vadd.f32 %v45, %v87
    %v110 = vadd.f32 %v46, %v91
    %v111 = vadd.f32 %v47, %v95
    %vm112 = vcmask 254976
    %113 = vst.msk [vmem:[#allocation7] sm:$0x3] %vm112, %v104
    %114 = vst.msk [vmem:[#allocation7 + $0x2] sm:$0x3] %vm112, %v105
    %115 = vst.msk [vmem:[#allocation7 + $0x4] sm:$0x3] %vm112, %v106
    %116 = vst.msk [vmem:[#allocation7 + $0x6] sm:$0x3] %vm112, %v107
    %117 = vst.msk [vmem:[#allocation7 + $0x8] sm:$0x3] %vm112, %v108
    %118 = vst.msk [vmem:[#allocation7 + $0xa] sm:$0x3] %vm112, %v109
    %119 = vst.msk [vmem:[#allocation7 + $0xc] sm:$0x3] %vm112, %v110
    %120 = vst.msk [vmem:[#allocation7 + $0xe] sm:$0x3] %vm112, %v111
    // Predicated region
    $region18: #{tpu_custom_call.1} parent=1 // pred_check
      _
    $region19: #{tpu_custom_call.1} parent=1 // pred_check_branch
      %122 = sbr.rel (0) target = $region21
    $region20: #{tpu_custom_call.1} parent=1 // pred_region
      %s124 = ssub.s32 256, 256
      %125 = vsyncadd [#allocation4], %s124
      %s126 = sshll.u32 [#allocation7], 4
      %s127 = int_to_ptr.vmem [resolvable:$true] %s126
      %132 = dma.vmem_to_hbm [thread:$0]  %s127, 256, %s2, [#allocation4], 32, 32, 2
    $region21: #{tpu_custom_call.1} parent=1 // pred_fallthru
      _
    // Predicated region
    $region22: #{tpu_custom_call.1} parent=1 // pred_check
      _
    $region23: #{tpu_custom_call.1} parent=1 // pred_check_branch
      %134 = sbr.rel (0) target = $region25
    $region24: #{tpu_custom_call.1} parent=1 // pred_region
      %135 = dma.done [#allocation4], 256
    $region25: #{tpu_custom_call.1} parent=1 // pred_fallthru
      _
    %136 = vsyncpa [#allocation3], 1
    %137 = vsyncpa [#allocation6], 1
    %138 = vsyncpa [#allocation4], 1

</llo_original>
